<compile_context>
chip_gen: v7x
topology: tpu7x:2x2x1
jax: 0.10.0
libtpu: 0.0.40
codegen_flags: <defaults>
</compile_context>

<pallas_src>
import functools

import jax
import jax.numpy as jnp
from jax.experimental import pallas as pl
from jax.experimental.pallas import tpu as pltpu


# --------------------------------------------------------------------------------------
# In-kernel helpers
# --------------------------------------------------------------------------------------

def _layernorm(x, g, b, eps=1e-5):
    """Row-wise LayerNorm in f32. x: (rows, D); g, b: (1, D)."""
    mu = jnp.mean(x, axis=-1, keepdims=True)
    xc = x - mu
    var = jnp.mean(xc * xc, axis=-1, keepdims=True)
    return xc * jax.lax.rsqrt(var + eps) * g + b


# --------------------------------------------------------------------------------------
# Kernel 1: patch-embed matmul + cls token + positional embedding + ln_pre (fused)
# --------------------------------------------------------------------------------------

def _embed_kernel(p_ref, w_ref, clspos_ref, posp_ref, g_ref, b_ref, o_ref):
    g = g_ref[...].astype(jnp.float32)
    b = b_ref[...].astype(jnp.float32)
    # patch embedding: (Np, C*P*P) @ (C*P*P, W) on the MXU, bf16 operands / f32 acc.
    emb = jnp.dot(p_ref[...].astype(jnp.bfloat16), w_ref[...],
                  preferred_element_type=jnp.float32)
    emb = emb + posp_ref[...]                              # pos embedding for patch rows
    cls_row = clspos_ref[...].astype(jnp.float32)          # cls + pos[0]
    # ln_pre applied row-wise; write cls row and patch rows of the token slab.
    o_ref[0:1, :] = _layernorm(cls_row, g, b).astype(o_ref.dtype)
    o_ref[1:, :] = _layernorm(emb, g, b).astype(o_ref.dtype)


def patch_embed_prologue(patches, conv_w, cls, pos, ln_g, ln_b):
    BT, Np, CPP = patches.shape
    Wd = conv_w.shape[1]
    N = Np + 1
    clspos = (cls + pos[0]).reshape(1, Wd)
    posp = pos[1:]
    return pl.pallas_call(
        _embed_kernel,
        grid=(BT,),
        in_specs=[
            pl.BlockSpec((None, Np, CPP), lambda bt: (bt, 0, 0)),
            pl.BlockSpec((CPP, Wd), lambda bt: (0, 0)),
            pl.BlockSpec((1, Wd), lambda bt: (0, 0)),
            pl.BlockSpec((Np, Wd), lambda bt: (0, 0)),
            pl.BlockSpec((1, Wd), lambda bt: (0, 0)),
            pl.BlockSpec((1, Wd), lambda bt: (0, 0)),
        ],
        out_specs=pl.BlockSpec((None, N, Wd), lambda bt: (bt, 0, 0)),
        out_shape=jax.ShapeDtypeStruct((BT, N, Wd), jnp.float32),
        compiler_params=pltpu.CompilerParams(dimension_semantics=("parallel",)),
    )(patches, conv_w.astype(jnp.bfloat16), clspos, posp,
      ln_g.reshape(1, Wd), ln_b.reshape(1, Wd))


# --------------------------------------------------------------------------------------
# Kernel 2: fused attention residual sub-block (LN1 -> QKV -> MHA -> out-proj -> +res)
# --------------------------------------------------------------------------------------

def _attn_block_kernel(x_ref, g1_ref, b1_ref, wqkv_ref, bqkv_ref, wout_ref,
                       bout_ref, o_ref, qkv_sc, *, heads, dh, scale):
    x = x_ref[...].astype(jnp.float32)                     # (N, W) lane-dense
    W = heads * dh
    h = _layernorm(x, g1_ref[...], b1_ref[...])
    # QKV projection: (N, W) @ (W, 3W) on the MXU, bf16 operands / f32 acc.
    qkv_sc[...] = (jnp.dot(h.astype(jnp.bfloat16), wqkv_ref[...],
                           preferred_element_type=jnp.float32) + bqkv_ref[...])

    acc = jnp.zeros_like(x)                                # (N, W) f32
    for hi in range(heads):                                # static unroll over heads
        lo = hi * dh
        qh = qkv_sc[:, lo:lo + dh]
        kh = qkv_sc[:, W + lo:W + lo + dh]
        vh = qkv_sc[:, 2 * W + lo:2 * W + lo + dh]
        s = jnp.einsum("nd,md->nm",
                       qh.astype(jnp.bfloat16), kh.astype(jnp.bfloat16),
                       preferred_element_type=jnp.float32) * scale
        m = jnp.max(s, axis=-1, keepdims=True)             # stable softmax in f32
        p = jnp.exp(s - m)
        l = jnp.sum(p, axis=-1, keepdims=True)
        p = p * pl.reciprocal(l, approx=True)              # EUP reciprocal (free slot)
        oh = jnp.dot(p.astype(jnp.bfloat16), vh.astype(jnp.bfloat16),
                     preferred_element_type=jnp.float32)   # (N, dh)
        # Fold the head-concat into the output projection: acc += o_h @ W_out[h*dh:(h+1)*dh]
        acc = acc + jnp.dot(oh.astype(jnp.bfloat16), wout_ref[lo:lo + dh, :],
                            preferred_element_type=jnp.float32)

    o_ref[...] = (x + acc + bout_ref[...]).astype(o_ref.dtype)   # fused residual + bias


def attention_block(x, blk, heads):
    BT, N, Wd = x.shape
    dh = Wd // heads
    scale = 1.0 / float(dh) ** 0.5
    tok_spec = pl.BlockSpec((None, N, Wd), lambda bt: (bt, 0, 0))
    vec = lambda d: pl.BlockSpec((1, d), lambda bt: (0, 0))
    return pl.pallas_call(
        functools.partial(_attn_block_kernel, heads=heads, dh=dh, scale=scale),
        grid=(BT,),
        in_specs=[
            tok_spec,
            vec(Wd), vec(Wd),
            pl.BlockSpec((Wd, 3 * Wd), lambda bt: (0, 0)), vec(3 * Wd),
            pl.BlockSpec((Wd, Wd), lambda bt: (0, 0)), vec(Wd),
        ],
        out_specs=tok_spec,
        out_shape=jax.ShapeDtypeStruct((BT, N, Wd), jnp.float32),
        scratch_shapes=[pltpu.VMEM((N, 3 * Wd), jnp.float32)],
        compiler_params=pltpu.CompilerParams(dimension_semantics=("parallel",)),
    )(x, blk["ln1_g"].reshape(1, Wd), blk["ln1_b"].reshape(1, Wd),
      blk["w_qkv"].astype(jnp.bfloat16), blk["b_qkv"].reshape(1, 3 * Wd),
      blk["w_out"].astype(jnp.bfloat16), blk["b_out"].reshape(1, Wd))


# --------------------------------------------------------------------------------------
# Kernel 3: fused MLP residual sub-block (LN2 -> fc -> QuickGELU -> proj -> +res [-> ln_post])
# --------------------------------------------------------------------------------------

def _mlp_block_kernel(x_ref, g2_ref, b2_ref, wfc_ref, bfc_ref, wproj_ref,
                      bproj_ref, *rest, final_ln):
    if final_ln:
        gpost_ref, bpost_ref, o_ref = rest
    else:
        (o_ref,) = rest
    x = x_ref[...].astype(jnp.float32)                     # (N, W)
    h = _layernorm(x, g2_ref[...], b2_ref[...])
    h = jnp.dot(h.astype(jnp.bfloat16), wfc_ref[...],
                preferred_element_type=jnp.float32) + bfc_ref[...]
    h = h * jax.nn.sigmoid(1.702 * h)                      # QuickGELU in f32 (VPU/EUP)
    h = jnp.dot(h.astype(jnp.bfloat16), wproj_ref[...],
                preferred_element_type=jnp.float32) + bproj_ref[...]
    y = x + h                                              # fused residual
    if final_ln:
        y = _layernorm(y, gpost_ref[...], bpost_ref[...])  # fused ln_post on last block
    o_ref[...] = y.astype(o_ref.dtype)


def mlp_block(x, blk, ln_post=None):
    BT, N, Wd = x.shape
    Dm = blk["w_fc"].shape[1]
    tok_spec = pl.BlockSpec((None, N, Wd), lambda bt: (bt, 0, 0))
    vec = lambda d: pl.BlockSpec((1, d), lambda bt: (0, 0))
    in_specs = [
        tok_spec, vec(Wd), vec(Wd),
        pl.BlockSpec((Wd, Dm), lambda bt: (0, 0)), vec(Dm),
        pl.BlockSpec((Dm, Wd), lambda bt: (0, 0)), vec(Wd),
    ]
    args = [x, blk["ln2_g"].reshape(1, Wd), blk["ln2_b"].reshape(1, Wd),
            blk["w_fc"].astype(jnp.bfloat16), blk["b_fc"].reshape(1, Dm),
            blk["w_proj"].astype(jnp.bfloat16), blk["b_proj"].reshape(1, Wd)]
    final_ln = ln_post is not None
    if final_ln:
        in_specs += [vec(Wd), vec(Wd)]
        args += [ln_post[0].reshape(1, Wd), ln_post[1].reshape(1, Wd)]
    return pl.pallas_call(
        functools.partial(_mlp_block_kernel, final_ln=final_ln),
        grid=(BT,),
        in_specs=in_specs,
        out_specs=tok_spec,
        out_shape=jax.ShapeDtypeStruct((BT, N, Wd), jnp.float32),
        compiler_params=pltpu.CompilerParams(dimension_semantics=("parallel",)),
    )(*args)


# --------------------------------------------------------------------------------------
# Model (parameters + forward glue)
# --------------------------------------------------------------------------------------

class Config:
    in_channels = 3
    image_size = 16
    patch_size = 8
    width = 32
    layers = 2
    heads = 4
    mlp_ratio = 4


def init_params(cfg, key):
    ks = iter(jax.random.split(key, 64))
    W = cfg.width
    P = cfg.patch_size
    C = cfg.in_channels
    n_tok = 1 + (cfg.image_size // P) ** 2
    s = 0.02

    def nrm(shape):
        return s * jax.random.normal(next(ks), shape, jnp.float32)

    params = {
        # conv1 weight (PyTorch layout: [width, C, P, P], bias=False) stored pre-flattened.
        "conv_w": nrm((C * P * P, W)),
        "cls": nrm((W,)),
        "pos": nrm((n_tok, W)),
        "ln_pre_g": jnp.ones((W,), jnp.float32),
        "ln_pre_b": jnp.zeros((W,), jnp.float32),
        "ln_post_g": jnp.ones((W,), jnp.float32),
        "ln_post_b": jnp.zeros((W,), jnp.float32),
        "blocks": [],
    }
    for _ in range(cfg.layers):
        blk = {
            "ln1_g": jnp.ones((W,), jnp.float32),
            "ln1_b": jnp.zeros((W,), jnp.float32),
            "w_qkv": nrm((W, 3 * W)),
            "b_qkv": jnp.zeros((3 * W,), jnp.float32),
            "w_out": nrm((W, W)),
            "b_out": jnp.zeros((W,), jnp.float32),
            "ln2_g": jnp.ones((W,), jnp.float32),
            "ln2_b": jnp.zeros((W,), jnp.float32),
            "w_fc": nrm((W, cfg.mlp_ratio * W)),
            "b_fc": jnp.zeros((cfg.mlp_ratio * W,), jnp.float32),
            "w_proj": nrm((cfg.mlp_ratio * W, W)),
            "b_proj": jnp.zeros((W,), jnp.float32),
        }
        params["blocks"].append(blk)
    return params


def clip_vit_forward(x_list, params, cfg):
    """x_list: single-pathway list, x_list[0] of shape [B, C, T, H, W] (PyTorch NCTHW)."""
    x = x_list[0].astype(jnp.float32)
    B, C, T, H, Wimg = x.shape
    P = cfg.patch_size
    gh, gw = H // P, Wimg // P
    Wd = cfg.width

    # ---- per-frame patch extraction (conv stride=P == patch flatten), plain-JAX glue ----
    x = x.transpose(0, 2, 1, 3, 4).reshape(B * T, C, H, Wimg)                  # (BT, C, H, W)
    patches = x.reshape(B * T, C, gh, P, gw, P).transpose(0, 2, 4, 1, 3, 5)    # (BT, gh, gw, C, P, P)
    patches = patches.reshape(B * T, gh * gw, C * P * P)                       # (BT, Np, CPP)

    # ---- fused: patch-embed matmul + cls token + pos embedding + ln_pre ----
    tok = patch_embed_prologue(patches, params["conv_w"], params["cls"],
                               params["pos"], params["ln_pre_g"], params["ln_pre_b"])

    # ---- transformer: 2 fused kernels per residual block; ln_post fused into the last ----
    n_blocks = len(params["blocks"])
    for i, blk in enumerate(params["blocks"]):
        tok = attention_block(tok, blk, cfg.heads)
        ln_post = ((params["ln_post_g"], params["ln_post_b"])
                   if i == n_blocks - 1 else None)
        tok = mlp_block(tok, blk, ln_post=ln_post)

    # ---- strip class token, fold back to spatio-temporal feature map ----
    feat = tok[:, 1:, :].reshape(B, T, gh, gw, Wd).transpose(0, 4, 1, 2, 3)    # (B, width, T, gh, gw)
    return [feat]


# --------------------------------------------------------------------------------------
# Main
# --------------------------------------------------------------------------------------

if __name__ == "__main__":
    cfg = Config()
    key = jax.random.PRNGKey(0)
    k_param, k_data = jax.random.split(key)

    params = init_params(cfg, k_param)

    B, C, T, H, W = 2, cfg.in_channels, 2, cfg.image_size, cfg.image_size
    x = jax.random.normal(k_data, (B, C, T, H, W), jnp.float32)

    out = clip_vit_forward([x], params, cfg)
    out = jax.block_until_ready(out[0])

    assert out.shape == (B, cfg.width, T, H // cfg.patch_size, W // cfg.patch_size), out.shape
    assert jnp.all(jnp.isfinite(out))
    print("KERNEL_OK")
</pallas_src>

<mosaic_0001>
module attributes {stable_mosaic.version = 11 : i64} {
  func.func @_embed_kernel(%arg0: i32, %arg1: memref<1x4x192xf32, #tpu.memory_space<vmem>>, %arg2: memref<192x32xbf16, #tpu.memory_space<vmem>>, %arg3: memref<1x32xf32, #tpu.memory_space<vmem>>, %arg4: memref<4x32xf32, #tpu.memory_space<vmem>>, %arg5: memref<1x32xf32, #tpu.memory_space<vmem>>, %arg6: memref<1x32xf32, #tpu.memory_space<vmem>>, %arg7: memref<1x5x32xf32, #tpu.memory_space<vmem>>) attributes {dimension_semantics = [#tpu.dimension_semantics<parallel>], iteration_bounds = array<i64: 4>, scalar_prefetch = 0 : i64, scratch_operands = 0 : i64, tpu.core_type = #tpu.core_type<tc>, window_params = [{transform_indices = @transform_0, window_bounds = array<i64: 1, 4, 192>}, {pipeline_mode = #tpu.pipeline_mode<synchronous>, transform_indices = @transform_1, window_bounds = array<i64: 192, 32>}, {pipeline_mode = #tpu.pipeline_mode<synchronous>, transform_indices = @transform_2, window_bounds = array<i64: 1, 32>}, {pipeline_mode = #tpu.pipeline_mode<synchronous>, transform_indices = @transform_3, window_bounds = array<i64: 4, 32>}, {pipeline_mode = #tpu.pipeline_mode<synchronous>, transform_indices = @transform_4, window_bounds = array<i64: 1, 32>}, {pipeline_mode = #tpu.pipeline_mode<synchronous>, transform_indices = @transform_5, window_bounds = array<i64: 1, 32>}, {transform_indices = @transform_6, window_bounds = array<i64: 1, 5, 32>}]} {
    %c0 = arith.constant 0 : index
    %c0_0 = arith.constant 0 : index
    %0 = vector.load %arg5[%c0, %c0_0] : memref<1x32xf32, #tpu.memory_space<vmem>>, vector<1x32xf32>
    %c0_1 = arith.constant 0 : index
    %c0_2 = arith.constant 0 : index
    %1 = vector.load %arg6[%c0_1, %c0_2] : memref<1x32xf32, #tpu.memory_space<vmem>>, vector<1x32xf32>
    %c0_3 = arith.constant 0 : index
    %c0_4 = arith.constant 0 : index
    %c0_5 = arith.constant 0 : index
    %2 = vector.load %arg1[%c0_3, %c0_4, %c0_5] : memref<1x4x192xf32, #tpu.memory_space<vmem>>, vector<1x4x192xf32>
    %3 = vector.shape_cast %2 : vector<1x4x192xf32> to vector<4x192xf32>
    %4 = arith.truncf %3 : vector<4x192xf32> to vector<4x192xbf16>
    %c0_6 = arith.constant 0 : index
    %c0_7 = arith.constant 0 : index
    %5 = vector.load %arg2[%c0_6, %c0_7] : memref<192x32xbf16, #tpu.memory_space<vmem>>, vector<192x32xbf16>
    %cst = arith.constant dense<0.000000e+00> : vector<4x32xf32>
    %6 = tpu.matmul %4, %5, %cst {dimension_numbers = #tpu.dot_dimension_numbers<[1], [0], [0], [1], [0, 0, 1, 1], [], []>} : vector<4x192xbf16>, vector<192x32xbf16>, vector<4x32xf32> -> vector<4x32xf32>
    %c0_8 = arith.constant 0 : index
    %c0_9 = arith.constant 0 : index
    %7 = vector.load %arg4[%c0_8, %c0_9] : memref<4x32xf32, #tpu.memory_space<vmem>>, vector<4x32xf32>
    %8 = arith.addf %6, %7 : vector<4x32xf32>
    %c0_10 = arith.constant 0 : index
    %c0_11 = arith.constant 0 : index
    %9 = vector.load %arg3[%c0_10, %c0_11] : memref<1x32xf32, #tpu.memory_space<vmem>>, vector<1x32xf32>
    %cst_12 = arith.constant dense<0.000000e+00> : vector<1xf32>
    %10 = vector.multi_reduction <add>, %9, %cst_12 [1] : vector<1x32xf32> to vector<1xf32>
    %11 = vector.shape_cast %10 : vector<1xf32> to vector<1x1xf32>
    %cst_13 = arith.constant 3.200000e+01 : f32
    %12 = vector.broadcast %cst_13 : f32 to vector<1x1xf32>
    %13 = arith.divf %11, %12 : vector<1x1xf32>
    %14 = vector.broadcast %13 : vector<1x1xf32> to vector<1x32xf32>
    %15 = arith.subf %9, %14 : vector<1x32xf32>
    %16 = arith.mulf %15, %15 : vector<1x32xf32>
    %cst_14 = arith.constant dense<0.000000e+00> : vector<1xf32>
    %17 = vector.multi_reduction <add>, %16, %cst_14 [1] : vector<1x32xf32> to vector<1xf32>
    %18 = vector.shape_cast %17 : vector<1xf32> to vector<1x1xf32>
    %cst_15 = arith.constant 3.200000e+01 : f32
    %19 = vector.broadcast %cst_15 : f32 to vector<1x1xf32>
    %20 = arith.divf %18, %19 : vector<1x1xf32>
    %cst_16 = arith.constant 9.99999974E-6 : f32
    %21 = vector.broadcast %cst_16 : f32 to vector<1x1xf32>
    %22 = arith.addf %20, %21 : vector<1x1xf32>
    %23 = math.rsqrt %22 : vector<1x1xf32>
    %24 = vector.broadcast %23 : vector<1x1xf32> to vector<1x32xf32>
    %25 = arith.mulf %15, %24 : vector<1x32xf32>
    %26 = arith.mulf %25, %0 : vector<1x32xf32>
    %27 = arith.addf %26, %1 : vector<1x32xf32>
    %c0_17 = arith.constant 0 : index
    %c0_18 = arith.constant 0 : index
    %c0_19 = arith.constant 0 : index
    %28 = vector.load %arg7[%c0_17, %c0_18, %c0_19] : memref<1x5x32xf32, #tpu.memory_space<vmem>>, vector<1x1x32xf32>
    %29 = vector.shape_cast %28 : vector<1x1x32xf32> to vector<1x32xf32>
    %30 = vector.shape_cast %27 : vector<1x32xf32> to vector<1x1x32xf32>
    tpu.vector_store %arg7[%c0_17, %c0_18, %c0_19], %30 {strides = array<i32>} : memref<1x5x32xf32, #tpu.memory_space<vmem>>, vector<1x1x32xf32>,
    %cst_20 = arith.constant dense<0.000000e+00> : vector<4xf32>
    %31 = vector.multi_reduction <add>, %8, %cst_20 [1] : vector<4x32xf32> to vector<4xf32>
    %32 = vector.shape_cast %31 : vector<4xf32> to vector<4x1xf32>
    %cst_21 = arith.constant 3.200000e+01 : f32
    %33 = vector.broadcast %cst_21 : f32 to vector<4x1xf32>
    %34 = arith.divf %32, %33 : vector<4x1xf32>
    %35 = vector.broadcast %34 : vector<4x1xf32> to vector<4x32xf32>
    %36 = arith.subf %8, %35 : vector<4x32xf32>
    %37 = arith.mulf %36, %36 : vector<4x32xf32>
    %cst_22 = arith.constant dense<0.000000e+00> : vector<4xf32>
    %38 = vector.multi_reduction <add>, %37, %cst_22 [1] : vector<4x32xf32> to vector<4xf32>
    %39 = vector.shape_cast %38 : vector<4xf32> to vector<4x1xf32>
    %cst_23 = arith.constant 3.200000e+01 : f32
    %40 = vector.broadcast %cst_23 : f32 to vector<4x1xf32>
    %41 = arith.divf %39, %40 : vector<4x1xf32>
    %cst_24 = arith.constant 9.99999974E-6 : f32
    %42 = vector.broadcast %cst_24 : f32 to vector<4x1xf32>
    %43 = arith.addf %41, %42 : vector<4x1xf32>
    %44 = math.rsqrt %43 : vector<4x1xf32>
    %45 = vector.broadcast %44 : vector<4x1xf32> to vector<4x32xf32>
    %46 = arith.mulf %36, %45 : vector<4x32xf32>
    %47 = vector.broadcast %0 : vector<1x32xf32> to vector<4x32xf32>
    %48 = arith.mulf %46, %47 : vector<4x32xf32>
    %49 = vector.broadcast %1 : vector<1x32xf32> to vector<4x32xf32>
    %50 = arith.addf %48, %49 : vector<4x32xf32>
    %c0_25 = arith.constant 0 : index
    %c1 = arith.constant 1 : index
    %c0_26 = arith.constant 0 : index
    %51 = vector.load %arg7[%c0_25, %c1, %c0_26] : memref<1x5x32xf32, #tpu.memory_space<vmem>>, vector<1x4x32xf32>
    %52 = vector.shape_cast %51 : vector<1x4x32xf32> to vector<4x32xf32>
    %53 = vector.shape_cast %50 : vector<4x32xf32> to vector<1x4x32xf32>
    tpu.vector_store %arg7[%c0_25, %c1, %c0_26], %53 {strides = array<i32>} : memref<1x5x32xf32, #tpu.memory_space<vmem>>, vector<1x4x32xf32>,
    return
  }
  func.func @transform_0(%arg0: i32) -> (i32, i32, i32) {
    %c0_i32 = arith.constant 0 : i32
    %c0_i32_0 = arith.constant 0 : i32
    %c0_i32_1 = arith.constant 0 : i32
    return %arg0, %c0_i32, %c0_i32_0 : i32, i32, i32
  }
  func.func @transform_1(%arg0: i32) -> (i32, i32) {
    %c0_i32 = arith.constant 0 : i32
    %c0_i32_0 = arith.constant 0 : i32
    %c0_i32_1 = arith.constant 0 : i32
    return %c0_i32, %c0_i32_0 : i32, i32
  }
  func.func @transform_2(%arg0: i32) -> (i32, i32) {
    %c0_i32 = arith.constant 0 : i32
    %c0_i32_0 = arith.constant 0 : i32
    %c0_i32_1 = arith.constant 0 : i32
    return %c0_i32, %c0_i32_0 : i32, i32
  }
  func.func @transform_3(%arg0: i32) -> (i32, i32) {
    %c0_i32 = arith.constant 0 : i32
    %c0_i32_0 = arith.constant 0 : i32
    %c0_i32_1 = arith.constant 0 : i32
    return %c0_i32, %c0_i32_0 : i32, i32
  }
  func.func @transform_4(%arg0: i32) -> (i32, i32) {
    %c0_i32 = arith.constant 0 : i32
    %c0_i32_0 = arith.constant 0 : i32
    %c0_i32_1 = arith.constant 0 : i32
    return %c0_i32, %c0_i32_0 : i32, i32
  }
  func.func @transform_5(%arg0: i32) -> (i32, i32) {
    %c0_i32 = arith.constant 0 : i32
    %c0_i32_0 = arith.constant 0 : i32
    %c0_i32_1 = arith.constant 0 : i32
    return %c0_i32, %c0_i32_0 : i32, i32
  }
  func.func @transform_6(%arg0: i32) -> (i32, i32, i32) {
    %c0_i32 = arith.constant 0 : i32
    %c0_i32_0 = arith.constant 0 : i32
    %c0_i32_1 = arith.constant 0 : i32
    return %arg0, %c0_i32, %c0_i32_0 : i32, i32, i32
  }
}

</mosaic_0001>

<llo_original>
// kernel: tpu_custom_call.1
$region0: #{tpu_custom_call.1}
  #allocation0 [shape = 'u32[]', space=smem, size = 0x4, offset = 0x4, fixed_abs, tag = 'smem constant byte address 0x4 - core index']
  #allocation1 [shape = 'u32[144,128]{1,0:T(1,128)}', space=vmem, size = 0x12000, scoped, tag = 'internal scratch']
  %s0 = inlined_call_operand.vmem [shape: f32[4,4,192], index: 0, kind: input, shape index: {}]
  %s1 = inlined_call_operand.vmem [shape: bf16[192,32], index: 1, kind: input, shape index: {}]
  %s2 = inlined_call_operand.vmem [shape: f32[1,32], index: 2, kind: input, shape index: {}]
  %s3 = inlined_call_operand.vmem [shape: f32[4,32], index: 3, kind: input, shape index: {}]
  %s4 = inlined_call_operand.vmem [shape: f32[1,32], index: 4, kind: input, shape index: {}]
  %s5 = inlined_call_operand.vmem [shape: f32[1,32], index: 5, kind: input, shape index: {}]
  %s6 = inlined_call_operand.vmem [shape: f32[4,5,32], index: 6, kind: output, shape index: {}]
  %s7 = sld [smem:[#allocation0]]
  $region57: #{tpu_custom_call.1} parent=0
    _
  %s9 = ssub.s32 1, %s7
  %s10 = scalar_select 0, %s9, %s7
  loop: start=0, step=1, limit=6
  $region2: #{tpu_custom_call.1} parent=0 // loop_pre_header
    _
  $region3: #{tpu_custom_call.1} parent=0 // loop_header
    %s12 = sphi 0, %s16
    %p13 = scmp.ge.s32.totalorder %s12, 6
    %s22 = sphi 0, %s24
    %s25 = sphi 0, %s22
    %s26 = sphi 0, %s25
    %s42 = sphi 0, %s26
    %s46 = sphi 0, %s46
    %s48 = sphi 0, %s46
    %s49 = sphi 0, %s48
    %s63 = sphi 0, %s49
    %s67 = sphi 0, %s67
    %s69 = sphi 0, %s67
    %s70 = sphi 0, %s69
    %s84 = sphi 0, %s70
    %s88 = sphi 0, %s88
    %s90 = sphi 0, %s88
    %s91 = sphi 0, %s90
    %s105 = sphi 0, %s91
    %s109 = sphi 0, %s109
    %s111 = sphi 0, %s109
    %s112 = sphi 0, %s111
    %s126 = sphi 0, %s112
    %s130 = sphi 0, %s130
    %s132 = sphi 0, %s130
    %s133 = sphi 0, %s132
    %s147 = sphi 0, %s133
    %s153 = sphi 0, %s155
    %s156 = sphi 0, %s153
    %s157 = sphi 0, %s156
    %s173 = sphi 0, %s157
  $region4: #{tpu_custom_call.1} parent=0 // loop_header_branch
    %15 = sbr.rel (%p13) target = $region8
  $region5: #{tpu_custom_call.1} parent=0 // loop_body
    %s17 = ssub.s32 %s12, 1
    %s18 = ssub.s32 %s12, 2
    %s19 = sadd.s32 %s12, 1
    %s20 = ssub.s32 %s12, %s19
    %p21 = scmp.eq.s32.totalorder %s20, 0
    %s23 = sadd.s32 %s22, 1
    %s24 = scalar_select %p21, %s22, %s23
    %p27 = pneg %p21
    %p28 = scmp.eq.s32.totalorder %s12, 3
    %p29 = por %p27, %p28
    %p30 = scmp.ne.s32.totalorder %s22, %s25
    %p31 = scmp.eq.s32.totalorder %s12, 0
    %p32 = por %p30, %p31
    %p33 = scmp.ne.s32.totalorder %s22, %s25
    %p34 = scmp.eq.s32.totalorder %s17, 3
    %p35 = por %p33, %p34
    %p36 = scmp.ne.s32.totalorder %s25, %s26
    %p37 = scmp.eq.s32.totalorder %s17, 0
    %p38 = por %p36, %p37
    %p39 = scmp.ne.s32.totalorder %s25, %s26
    %p40 = scmp.eq.s32.totalorder %s18, 3
    %p41 = por %p39, %p40
    %p43 = scmp.ne.s32.totalorder %s26, %s42
    %p44 = scmp.eq.s32.totalorder %s18, 0
    %p45 = por %p43, %p44
    %s47 = sadd.s32 %s46, 1
    %p50 = scmp.eq.s32.totalorder %s12, 3
    %p51 = scmp.ne.s32.totalorder %s46, %s48
    %p52 = scmp.eq.s32.totalorder %s12, 0
    %p53 = por %p51, %p52
    %p54 = scmp.ne.s32.totalorder %s46, %s48
    %p55 = scmp.eq.s32.totalorder %s17, 3
    %p56 = por %p54, %p55
    %p57 = scmp.ne.s32.totalorder %s48, %s49
    %p58 = scmp.eq.s32.totalorder %s17, 0
    %p59 = por %p57, %p58
    %p60 = scmp.ne.s32.totalorder %s48, %s49
    %p61 = scmp.eq.s32.totalorder %s18, 3
    %p62 = por %p60, %p61
    %p64 = scmp.ne.s32.totalorder %s49, %s63
    %p65 = scmp.eq.s32.totalorder %s18, 0
    %p66 = por %p64, %p65
    %s68 = sadd.s32 %s67, 1
    %p71 = scmp.eq.s32.totalorder %s12, 3
    %p72 = scmp.ne.s32.totalorder %s67, %s69
    %p73 = scmp.eq.s32.totalorder %s12, 0
    %p74 = por %p72, %p73
    %p75 = scmp.ne.s32.totalorder %s67, %s69
    %p76 = scmp.eq.s32.totalorder %s17, 3
    %p77 = por %p75, %p76
    %p78 = scmp.ne.s32.totalorder %s69, %s70
    %p79 = scmp.eq.s32.totalorder %s17, 0
    %p80 = por %p78, %p79
    %p81 = scmp.ne.s32.totalorder %s69, %s70
    %p82 = scmp.eq.s32.totalorder %s18, 3
    %p83 = por %p81, %p82
    %p85 = scmp.ne.s32.totalorder %s70, %s84
    %p86 = scmp.eq.s32.totalorder %s18, 0
    %p87 = por %p85, %p86
    %s89 = sadd.s32 %s88, 1
    %p92 = scmp.eq.s32.totalorder %s12, 3
    %p93 = scmp.ne.s32.totalorder %s88, %s90
    %p94 = scmp.eq.s32.totalorder %s12, 0
    %p95 = por %p93, %p94
    %p96 = scmp.ne.s32.totalorder %s88, %s90
    %p97 = scmp.eq.s32.totalorder %s17, 3
    %p98 = por %p96, %p97
    %p99 = scmp.ne.s32.totalorder %s90, %s91
    %p100 = scmp.eq.s32.totalorder %s17, 0
    %p101 = por %p99, %p100
    %p102 = scmp.ne.s32.totalorder %s90, %s91
    %p103 = scmp.eq.s32.totalorder %s18, 3
    %p104 = por %p102, %p103
    %p106 = scmp.ne.s32.totalorder %s91, %s105
    %p107 = scmp.eq.s32.totalorder %s18, 0
    %p108 = por %p106, %p107
    %s110 = sadd.s32 %s109, 1
    %p113 = scmp.eq.s32.totalorder %s12, 3
    %p114 = scmp.ne.s32.totalorder %s109, %s111
    %p115 = scmp.eq.s32.totalorder %s12, 0
    %p116 = por %p114, %p115
    %p117 = scmp.ne.s32.totalorder %s109, %s111
    %p118 = scmp.eq.s32.totalorder %s17, 3
    %p119 = por %p117, %p118
    %p120 = scmp.ne.s32.totalorder %s111, %s112
    %p121 = scmp.eq.s32.totalorder %s17, 0
    %p122 = por %p120, %p121
    %p123 = scmp.ne.s32.totalorder %s111, %s112
    %p124 = scmp.eq.s32.totalorder %s18, 3
    %p125 = por %p123, %p124
    %p127 = scmp.ne.s32.totalorder %s112, %s126
    %p128 = scmp.eq.s32.totalorder %s18, 0
    %p129 = por %p127, %p128
    %s131 = sadd.s32 %s130, 1
    %p134 = scmp.eq.s32.totalorder %s12, 3
    %p135 = scmp.ne.s32.totalorder %s130, %s132
    %p136 = scmp.eq.s32.totalorder %s12, 0
    %p137 = por %p135, %p136
    %p138 = scmp.ne.s32.totalorder %s130, %s132
    %p139 = scmp.eq.s32.totalorder %s17, 3
    %p140 = por %p138, %p139
    %p141 = scmp.ne.s32.totalorder %s132, %s133
    %p142 = scmp.eq.s32.totalorder %s17, 0
    %p143 = por %p141, %p142
    %p144 = scmp.ne.s32.totalorder %s132, %s133
    %p145 = scmp.eq.s32.totalorder %s18, 3
    %p146 = por %p144, %p145
    %p148 = scmp.ne.s32.totalorder %s133, %s147
    %p149 = scmp.eq.s32.totalorder %s18, 0
    %p150 = por %p148, %p149
    %s151 = ssub.s32 %s12, %s19
    %p152 = scmp.eq.s32.totalorder %s151, 0
    %s154 = sadd.s32 %s153, 1
    %s155 = scalar_select %p152, %s153, %s154
    %p158 = pneg %p152
    %p159 = scmp.eq.s32.totalorder %s12, 3
    %p160 = por %p158, %p159
    %p161 = scmp.ne.s32.totalorder %s153, %s156
    %p162 = scmp.eq.s32.totalorder %s12, 0
    %p163 = por %p161, %p162
    %p164 = scmp.ne.s32.totalorder %s153, %s156
    %p165 = scmp.eq.s32.totalorder %s17, 3
    %p166 = por %p164, %p165
    %p167 = scmp.ne.s32.totalorder %s156, %s157
    %p168 = scmp.eq.s32.totalorder %s17, 0
    %p169 = por %p167, %p168
    %p170 = scmp.ne.s32.totalorder %s156, %s157
    %p171 = scmp.eq.s32.totalorder %s18, 3
    %p172 = por %p170, %p171
    %p174 = scmp.ne.s32.totalorder %s157, %s173
    %p175 = scmp.eq.s32.totalorder %s18, 0
    %p176 = por %p174, %p175
    %p177 = scmp.le.s32.totalorder 1, %s12
    %p178 = scmp.lt.s32.totalorder %s12, 5
    %p179 = pnand %p177, %p178
    %p180 = pneg %p179
    // Predicated region
    $region9: #{tpu_custom_call.1} parent=5 // pred_check
      _
    $region10: #{tpu_custom_call.1} parent=5 // pred_check_branch
      %182 = sbr.rel (%p179) target = $region12
    $region11: #{tpu_custom_call.1} parent=5 // pred_region
      %s183 = ssub.s32 %s12, 1
      // Predicated region
      $region13: #{tpu_custom_call.1} parent=11 // pred_check
        %p184 = pneg %p59
      $region14: #{tpu_custom_call.1} parent=11 // pred_check_branch
        %186 = sbr.rel (%p184) target = $region16
      $region15: #{tpu_custom_call.1} parent=11 // pred_region
        _
      $region16: #{tpu_custom_call.1} parent=11 // pred_fallthru
        _
      // Predicated region
      $region17: #{tpu_custom_call.1} parent=11 // pred_check
        %p187 = pneg %p80
      $region18: #{tpu_custom_call.1} parent=11 // pred_check_branch
        %189 = sbr.rel (%p187) target = $region20
      $region19: #{tpu_custom_call.1} parent=11 // pred_region
        _
      $region20: #{tpu_custom_call.1} parent=11 // pred_fallthru
        _
      // Predicated region
      $region21: #{tpu_custom_call.1} parent=11 // pred_check
        %p190 = pneg %p101
      $region22: #{tpu_custom_call.1} parent=11 // pred_check_branch
        %192 = sbr.rel (%p190) target = $region24
      $region23: #{tpu_custom_call.1} parent=11 // pred_region
        _
      $region24: #{tpu_custom_call.1} parent=11 // pred_fallthru
        _
      // Predicated region
      $region25: #{tpu_custom_call.1} parent=11 // pred_check
        %p193 = pneg %p122
      $region26: #{tpu_custom_call.1} parent=11 // pred_check_branch
        %195 = sbr.rel (%p193) target = $region28
      $region27: #{tpu_custom_call.1} parent=11 // pred_region
        _
      $region28: #{tpu_custom_call.1} parent=11 // pred_fallthru
        _
      // Predicated region
      $region29: #{tpu_custom_call.1} parent=11 // pred_check
        %p196 = pneg %p143
      $region30: #{tpu_custom_call.1} parent=11 // pred_check_branch
        %198 = sbr.rel (%p196) target = $region32
      $region31: #{tpu_custom_call.1} parent=11 // pred_region
        _
      $region32: #{tpu_custom_call.1} parent=11 // pred_fallthru
        _
    $region12: #{tpu_custom_call.1} parent=5 // pred_fallthru
      _
    %p199 = scmp.lt.s32.totalorder %s12, 4
    // Predicated region
    $region33: #{tpu_custom_call.1} parent=5 // pred_check
      %p200 = pneg %p199
    $region34: #{tpu_custom_call.1} parent=5 // pred_check_branch
      %202 = sbr.rel (%p200) target = $region36
    $region35: #{tpu_custom_call.1} parent=5 // pred_region
      // Predicated region
      $region37: #{tpu_custom_call.1} parent=35 // pred_check
        %p203 = pneg %p32
      $region38: #{tpu_custom_call.1} parent=35 // pred_check_branch
        %205 = sbr.rel (%p203) target = $region40
      $region39: #{tpu_custom_call.1} parent=35 // pred_region
        %p206 = scmp.lt.s32.totalorder %s12, 3
        %s207 = scalar_select %p206, %s12, 3
        %s208 = smul.addr %s207, 2
        %s209 = smul.addr %s208, 4
        %s210 = scalar_lea.vmem %s0, %s209
      $region40: #{tpu_custom_call.1} parent=35 // pred_fallthru
        _
    $region36: #{tpu_custom_call.1} parent=5 // pred_fallthru
      _
    %p211 = scmp.le.s32.totalorder 1, %s12
    %p212 = scmp.lt.s32.totalorder %s12, 5
    %p213 = pnand %p211, %p212
    %p214 = pneg %p213
    // Predicated region
    $region41: #{tpu_custom_call.1} parent=5 // pred_check
      _
    $region42: #{tpu_custom_call.1} parent=5 // pred_check_branch
      %216 = sbr.rel (%p213) target = $region44
    $region43: #{tpu_custom_call.1} parent=5 // pred_region
      %s217 = ssub.s32 %s12, 1
      %p218 = scmp.lt.s32.totalorder %s17, 3
      %s219 = scalar_select %p218, %s17, 3
      %s220 = smul.addr %s219, 2
      %s221 = smul.addr %s220, 4
      %s222 = scalar_lea.vmem %s0, %s221
      %p223 = pneg %p38
      %p224 = pneg %p35
      %p225 = pneg %p59
      %p226 = pneg %p56
      %p227 = pneg %p80
      %p228 = pneg %p77
      %p229 = pneg %p101
      %p230 = pneg %p98
      %p231 = pneg %p122
      %p232 = pneg %p119
      %p233 = pneg %p143
      %p234 = pneg %p140
      %p235 = pneg %p169
      %p236 = pneg %p166
      %p237 = scmp.lt.s32.totalorder %s17, 3
      %s238 = scalar_select %p237, %s17, 3
      %s239 = smul.addr %s238, 8
      %s240 = scalar_lea.vmem %s6, %s239
      %p241 = scmp.lt.s32.totalorder %s17, 3
      %s242 = scalar_select %p241, %s17, 3
      %s243 = smul.addr %s242, 2
      %s244 = smul.addr %s243, 4
      %s245 = scalar_lea.vmem %s0, %s244
      %p246 = scmp.lt.s32.totalorder %s17, 3
      %s247 = scalar_select %p246, %s17, 3
      %s248 = smul.addr %s247, 8
      %s249 = scalar_lea.vmem %s6, %s248
      %v251 = vld [vmem:[%s4] sm:$0x1]
      %v252 = vld [vmem:[%s5] sm:$0x1]
      %v253 = vld [vmem:[%s245] sm:$0xff]
      %v255 = vcombine.high %v253, %v253
      %v257 = vpack.c.bf16 %v253, %v253
      %v258 = vpack.c.bf16 %v255, %v255
      %v259 = vld [vmem:[%s1] sm:$0xf]
      %v260 = vld [vmem:[%s1 + $0x4] sm:$0xf]
      %v261 = vld [vmem:[%s1 + $0x8] sm:$0xf]
      %v262 = vld [vmem:[%s1 + $0xc] sm:$0xf]
      %v263 = vld [vmem:[%s1 + $0x10] sm:$0xf]
      %v264 = vld [vmem:[%s1 + $0x14] sm:$0xf]
      %v265 = vld [vmem:[%s1 + $0x18] sm:$0xf]
      %v266 = vld [vmem:[%s1 + $0x1c] sm:$0xf]
      %v267 = vld [vmem:[%s1 + $0x20] sm:$0xf]
      %v268 = vld [vmem:[%s1 + $0x24] sm:$0xf]
      %v269 = vld [vmem:[%s1 + $0x28] sm:$0xf]
      %v270 = vld [vmem:[%s1 + $0x2c] sm:$0xf]
      %v271 = vld [vmem:[%s1 + $0x30] sm:$0xf]
      %v272 = vld [vmem:[%s1 + $0x34] sm:$0xf]
      %v273 = vld [vmem:[%s1 + $0x38] sm:$0xf]
      %v274 = vld [vmem:[%s1 + $0x3c] sm:$0xf]
      %v275 = vld [vmem:[%s1 + $0x40] sm:$0xf]
      %v276 = vld [vmem:[%s1 + $0x44] sm:$0xf]
      %v277 = vld [vmem:[%s1 + $0x48] sm:$0xf]
      %v278 = vld [vmem:[%s1 + $0x4c] sm:$0xf]
      %v279 = vld [vmem:[%s1 + $0x50] sm:$0xf]
      %v280 = vld [vmem:[%s1 + $0x54] sm:$0xf]
      %v281 = vld [vmem:[%s1 + $0x58] sm:$0xf]
      %v282 = vld [vmem:[%s1 + $0x5c] sm:$0xf]
      %v283 = vld [vmem:[%s3] sm:$0xf]
      %v308 = vunpack.c.l.b16 %v259
      %v309 = vunpack.c.l.b16 %v260
      %v310 = vunpack.c.l.b16 %v261
      %v311 = vunpack.c.l.b16 %v262
      %v312 = vunpack.c.l.b16 %v263
      %v313 = vunpack.c.l.b16 %v264
      %v314 = vunpack.c.l.b16 %v265
      %v315 = vunpack.c.l.b16 %v266
      %v316 = vunpack.c.l.b16 %v267
      %v317 = vunpack.c.l.b16 %v268
      %v318 = vunpack.c.l.b16 %v269
      %v319 = vunpack.c.l.b16 %v270
      %v320 = vunpack.c.l.b16 %v271
      %v321 = vunpack.c.l.b16 %v272
      %v322 = vunpack.c.l.b16 %v273
      %v323 = vunpack.c.l.b16 %v274
      %v324 = vunpack.c.l.b16 %v275
      %v325 = vunpack.c.l.b16 %v276
      %v326 = vunpack.c.l.b16 %v277
      %v327 = vunpack.c.l.b16 %v278
      %v328 = vunpack.c.l.b16 %v279
      %v329 = vunpack.c.l.b16 %v280
      %v330 = vunpack.c.l.b16 %v281
      %v331 = vunpack.c.l.b16 %v282
      %v332 = vpack.c.b16 %v309, %v308
      %v333 = vpack.c.b16 %v311, %v310
      %v334 = vpack.c.b16 %v313, %v312
      %v335 = vpack.c.b16 %v315, %v314
      %v336 = vpack.c.b16 %v317, %v316
      %v337 = vpack.c.b16 %v319, %v318
      %v338 = vpack.c.b16 %v321, %v320
      %v339 = vpack.c.b16 %v323, %v322
      %v340 = vpack.c.b16 %v325, %v324
      %v341 = vpack.c.b16 %v327, %v326
      %v342 = vpack.c.b16 %v329, %v328
      %v343 = vpack.c.b16 %v331, %v330
      %vm356 = vcmask 523264
      %v358 = vsel %vm356, %v258, 0
      %360 = vmatprep.subr.bf16.mxu0 0
      %361 = vmatpush1.bf16.msra.mxu0 %v332
      %362 = vmatprep.subr.bf16.mxu0 0
      %363 = vmatpush1.bf16.msra.mxu0 %v333
      %364 = vmatprep.subr.bf16.mxu0 0
      %365 = vmatpush1.bf16.msra.mxu0 %v334
      %366 = vmatprep.subr.bf16.mxu0 0
      %367 = vmatpush1.bf16.msra.mxu0 %v335
      %368 = vmatprep.subr.bf16.mxu0 0
      %369 = vmatpush1.bf16.msra.mxu0 %v336
      %370 = vmatprep.subr.bf16.mxu0 0
      %371 = vmatpush1.bf16.msra.mxu0 %v337
      %372 = vmatprep.subr.bf16.mxu0 0
      %373 = vmatpush1.bf16.msra.mxu0 %v338
      %374 = vmatprep.subr.bf16.mxu0 0
      %375 = vmatpush1.bf16.msra.mxu0 %v339
      %376 = vmatprep.subr.bf16.mxu0 0
      %377 = vmatpush1.bf16.msra.mxu0 %v340
      %378 = vmatprep.subr.bf16.mxu0 0
      %379 = vmatpush1.bf16.msra.mxu0 %v341
      %380 = vmatprep.subr.bf16.mxu0 0
      %381 = vmatpush1.bf16.msra.mxu0 %v342
      %382 = vmatprep.subr.bf16.mxu0 0
      %383 = vmatpush1.bf16.msra.mxu0 %v343
      %384 = vmatprep.subr.bf16.mxu0 0
      %385 = vmatpush1.bf16.msra.mxu0 0
      %386 = vmatprep.subr.bf16.mxu0 0
      %387 = vmatpush1.bf16.msra.mxu0 0
      %388 = vmatprep.subr.bf16.mxu0 0
      %389 = vmatpush1.bf16.msra.mxu0 0
      %390 = vmatprep.subr.bf16.mxu0 0
      %391 = vmatpush1.bf16.msra.mxu0 0
      %392 = vmatprep.mubr.bf16.mxu0 %v358
      %393 = vmatmul.mubr.bf16.gmra.mrb[0].mxu0 %v257
      %v394 = vpop.f32.mrb[0].mxu0
      %v395 = vadd.f32 %v283, %v394
      %v396 = vpop.f32.mrb[0].mxu0
      %v397 = vpop.f32.mrb[0].mxu0
      %v398 = vpop.f32.mrb[0].mxu0
      %399 = vdwg.mxu0
      %v400 = vld [vmem:[%s2] sm:$0x1]
      %vm401 = vcmask 253952
      %v402 = vsel %vm401, %v400, 0.0
      %403 = vadd.xlane.f32.xlu0 %v402
      %v404 = vpop.xlane.xlu0 %403
      %v405 = vrcp.pop 32.0
      %v406 = vmul.f32 %v404, %v405
      %v407 = vsub.f32 %v400, %v406
      %v408 = vmul.f32 %v407, %v407
      %v409 = vsel %vm401, %v408, 0.0
      %410 = vadd.xlane.f32.xlu0 %v409
      %v411 = vpop.xlane.xlu0 %410
      %v412 = vmul.f32 %v411, %v405
      %v413 = vadd.f32 %v412, 1e-05
      %v414 = vrsqrt.pop %v413
      %v415 = vmul.f32 %v407, %v414
      %v416 = vmul.f32 %v415, %v251
      %v417 = vadd.f32 %v416, %v252
      %418 = vst.msk [vmem:[%s249] sm:$0x1] %vm401, %v417
      %vm419 = vcmask 257024
      %v420 = vsel %vm419, %v395, 0.0
      %421 = vadd.xlane.f32.xlu0 %v420
      %v422 = vpop.xlane.xlu0 %421
      %v423 = vmul.f32 %v422, %v405
      %v424 = vsub.f32 %v395, %v423
      %v425 = vmul.f32 %v424, %v424
      %v426 = vsel %vm419, %v425, 0.0
      %427 = vadd.xlane.f32.xlu0 %v426
      %v428 = vpop.xlane.xlu0 %427
      %v429 = vmul.f32 %v428, %v405
      %v430 = vadd.f32 %v429, 1e-05
      %v431 = vrsqrt.pop %v430
      %v432 = vmul.f32 %v424, %v431
      %v434 = vlaneseq
      %v435 = vshrl.u32 %v434, 7
      %v436 = vsub.s32 0, %v435
      %v437 = vrot.slane %v251, %v436
      %v439 = vmul.f32 %v432, %v437
      %v441 = vlaneseq
      %v442 = vshrl.u32 %v441, 7
      %v443 = vsub.s32 0, %v442
      %v444 = vrot.slane %v252, %v443
      %v446 = vadd.f32 %v439, %v444
      %447 = vst.msk [vmem:[%s249 + $0x1] sm:$0xf] %vm419, %v446
      %p448 = scmp.lt.s32.totalorder %s17, 3
      %s449 = scalar_select %p448, %s17, 3
      %s450 = smul.addr %s449, 8
      %s451 = scalar_lea.vmem %s6, %s450
      // Predicated region
      $region45: #{tpu_custom_call.1} parent=43 // pred_check
        %p452 = pneg %p166
      $region46: #{tpu_custom_call.1} parent=43 // pred_check_branch
        %454 = sbr.rel (%p452) target = $region48
      $region47: #{tpu_custom_call.1} parent=43 // pred_region
        _
      $region48: #{tpu_custom_call.1} parent=43 // pred_fallthru
        _
    $region44: #{tpu_custom_call.1} parent=5 // pred_fallthru
      _
    %p455 = scmp.le.s32.totalorder 2, %s12
    // Predicated region
    $region49: #{tpu_custom_call.1} parent=5 // pred_check
      %p456 = pneg %p455
    $region50: #{tpu_custom_call.1} parent=5 // pred_check_branch
      %458 = sbr.rel (%p456) target = $region52
    $region51: #{tpu_custom_call.1} parent=5 // pred_region
      %s459 = ssub.s32 %s12, 2
      // Predicated region
      $region53: #{tpu_custom_call.1} parent=51 // pred_check
        %p460 = pneg %p172
      $region54: #{tpu_custom_call.1} parent=51 // pred_check_branch
        %462 = sbr.rel (%p460) target = $region56
      $region55: #{tpu_custom_call.1} parent=51 // pred_region
        %p463 = scmp.lt.s32.totalorder %s18, 3
        %s464 = scalar_select %p463, %s18, 3
        %s465 = smul.addr %s464, 8
        %s466 = scalar_lea.vmem %s6, %s465
      $region56: #{tpu_custom_call.1} parent=51 // pred_fallthru
        _
    $region52: #{tpu_custom_call.1} parent=5 // pred_fallthru
      _
  $region6: #{tpu_custom_call.1} parent=0 // loop_footer
    %s16 = sadd.s32 1, %s12
  $region7: #{tpu_custom_call.1} parent=0 // loop_footer_branch
    %11 = sbr.rel target = $region3
  $region8: #{tpu_custom_call.1} parent=0 // loop_exit
    _

</llo_original>
